<compile_context>
chip_gen: v6e
topology: v6e:2x2x1
jax: 0.10.0
libtpu: 0.0.40
codegen_flags: <defaults>
</compile_context>

<pallas_src>
import jax
import jax.numpy as jnp
from jax.experimental import pallas as pl
from jax.experimental.pallas import tpu as pltpu


def generator_kernel(x_ref, w1_ref, b1_ref, w2_ref, b2_ref, w3_ref, b3_ref, o_ref):
    # bf16 operands on the MXU, f32 accumulation, f32 activations, store o_ref.dtype.
    x = x_ref[...].astype(jnp.bfloat16)
    h = jnp.dot(x, w1_ref[...], preferred_element_type=jnp.float32) + b1_ref[...]
    h = jnp.maximum(h, 0.0).astype(jnp.bfloat16)                      # ReLU
    h = jnp.dot(h, w2_ref[...], preferred_element_type=jnp.float32) + b2_ref[...]
    h = jnp.maximum(h, 0.0).astype(jnp.bfloat16)                      # ReLU
    h = jnp.dot(h, w3_ref[...], preferred_element_type=jnp.float32) + b3_ref[...]
    # sigmoid(h) = 1 / (1 + exp(-h)); exp -> EUP, approx vrcp -> EUP when the
    # output is bf16 anyway (approx error << bf16 ulp); exact divide for f32.
    approx = o_ref.dtype == jnp.bfloat16
    o_ref[...] = pl.reciprocal(1.0 + jnp.exp(-h), approx=approx).astype(o_ref.dtype)


def _choose_batch_tile(B, tb_max):
    """Pick a batch tile TB.

    Preference order:
      1. TB divides B (no padding, no post-kernel slice copy) and is a
         multiple of 8 (BlockSpec (8,128) rule).
      2. >= 2 grid steps when B allows, so v7x's two TensorCores both get work.
      3. Whole batch as a single tile (block dim == full dim) if no divisor.
      4. Fall back to tb_max with padding (rare: B > tb_max and awkward).
    """
    if B <= 8:
        return B                                   # single tile == full dim
    best = None
    t = (min(tb_max, B) // 8) * 8
    while t >= 8:
        if B % t == 0:
            best = t
            break
        t -= 8
    if best is None:
        # No multiple-of-8 divisor: single full-batch tile if it fits, else pad.
        return min(tb_max, B)
    # Whole batch fits in one tile -> split in two for v7x megacore if possible.
    if best == B and B % 16 == 0 and (B // 2) <= tb_max:
        best = B // 2
    return best


def generator_forward(x, params, *, out_dtype=jnp.bfloat16, tb_max=None):
    """x: [B, random_dim] float32 -> [B, mnist_dim] `out_dtype` (default bf16)."""
    w1, b1, w2, b2, w3, b3 = params
    B, rd = x.shape
    out_dim = w3.shape[1]

    if tb_max is None:
        # Keep double-buffered out tile + f32 temporaries inside v7x's 64 MiB VMEM.
        tb_max = 2048 if out_dtype == jnp.bfloat16 else 1024

    TB = _choose_batch_tile(B, tb_max)
    n_blocks = pl.cdiv(B, TB)
    Bp = n_blocks * TB
    padded = Bp != B
    if padded:
        # Rare fallback (B > tb_max with no friendly divisor). Padding x is
        # cheap (10 f32/row); the tail slice below is the only extra copy.
        x = jnp.pad(x, ((0, Bp - B), (0, 0)))

    # Weights/biases: full-array blocks, constant block index -> VMEM-resident
    # across all grid steps (no re-DMA per batch tile).
    def resident(a):
        return pl.BlockSpec(a.shape, lambda i, nd=a.ndim: (0,) * nd)

    out = pl.pallas_call(
        generator_kernel,
        out_shape=jax.ShapeDtypeStruct((Bp, out_dim), out_dtype),
        grid=(n_blocks,),
        in_specs=[
            pl.BlockSpec((TB, rd), lambda i: (i, 0)),   # x: batch-tiled
            resident(w1), resident(b1),
            resident(w2), resident(b2),
            resident(w3), resident(b3),
        ],
        out_specs=pl.BlockSpec((TB, out_dim), lambda i: (i, 0)),
        compiler_params=pltpu.CompilerParams(
            dimension_semantics=("parallel",),          # megacore-shard batch on v7x
            vmem_limit_bytes=40 * 1024 * 1024,          # headroom for v5e's 16 MiB default
        ),
    )(x, w1, b1, w2, b2, w3, b3)

    if padded:
        out = out[:B]
    return out


def init_generator_params(key, random_dim=10, mnist_dim=28 * 28):
    """Matches the module init: weights ~ U(-0.05, 0.05), bias = 0.
    Weights are stored as (in, out) (PyTorch weight transposed) and cast to
    bf16 ONCE here so no per-call casts run under jit. Biases stay f32 (added
    to the f32 accumulator in-kernel)."""
    dims = [(random_dim, 32), (32, 128), (128, mnist_dim)]
    keys = jax.random.split(key, len(dims))
    params = []
    for k, (fan_in, fan_out) in zip(keys, dims):
        w = jax.random.uniform(k, (fan_in, fan_out), jnp.float32,
                               minval=-0.05, maxval=0.05)
        params.extend([w.astype(jnp.bfloat16), jnp.zeros((1, fan_out), jnp.float32)])
    return tuple(params)


if __name__ == "__main__":
    RANDOM_DIM = 10
    MNIST_DIM = 28 * 28
    BATCH = 8

    key = jax.random.PRNGKey(0)
    pkey, xkey = jax.random.split(key)

    params = init_generator_params(pkey, RANDOM_DIM, MNIST_DIM)
    # mimics Generator.sample_generator: uniform(-1, 1) latent noise
    x = jax.random.uniform(xkey, (BATCH, RANDOM_DIM), jnp.float32,
                           minval=-1.0, maxval=1.0)

    fwd = jax.jit(lambda x_, p_: generator_forward(x_, p_))
    out = fwd(x, params)
    out = jax.block_until_ready(out)

    # sanity check against plain-JAX f32 reference (bf16 weights upcast to f32;
    # looser tol due to bf16 weights/activations/output storage)
    w1, b1, w2, b2, w3, b3 = [p.astype(jnp.float32) for p in params]
    ref = jax.nn.sigmoid(
        jnp.maximum(jnp.maximum(x @ w1 + b1, 0.0) @ w2 + b2, 0.0) @ w3 + b3)
    out_f32 = out.astype(jnp.float32)
    assert out.shape == (BATCH, MNIST_DIM)
    assert jnp.allclose(out_f32, ref, atol=1e-2, rtol=1e-2), \
        float(jnp.max(jnp.abs(out_f32 - ref)))

    print("KERNEL_OK")
</pallas_src>

<mosaic_0001>
module attributes {stable_mosaic.version = 11 : i64} {
  func.func @generator_kernel(%arg0: i32, %arg1: memref<8x10xf32, #tpu.memory_space<vmem>>, %arg2: memref<10x32xbf16, #tpu.memory_space<vmem>>, %arg3: memref<1x32xf32, #tpu.memory_space<vmem>>, %arg4: memref<32x128xbf16, #tpu.memory_space<vmem>>, %arg5: memref<1x128xf32, #tpu.memory_space<vmem>>, %arg6: memref<128x784xbf16, #tpu.memory_space<vmem>>, %arg7: memref<1x784xf32, #tpu.memory_space<vmem>>, %arg8: memref<8x784xbf16, #tpu.memory_space<vmem>>) attributes {dimension_semantics = [#tpu.dimension_semantics<parallel>], iteration_bounds = array<i64: 1>, scalar_prefetch = 0 : i64, scratch_operands = 0 : i64, tpu.core_type = #tpu.core_type<tc>, window_params = [{transform_indices = @transform_0, window_bounds = array<i64: 8, 10>}, {pipeline_mode = #tpu.pipeline_mode<synchronous>, transform_indices = @transform_1, window_bounds = array<i64: 10, 32>}, {pipeline_mode = #tpu.pipeline_mode<synchronous>, transform_indices = @transform_2, window_bounds = array<i64: 1, 32>}, {pipeline_mode = #tpu.pipeline_mode<synchronous>, transform_indices = @transform_3, window_bounds = array<i64: 32, 128>}, {pipeline_mode = #tpu.pipeline_mode<synchronous>, transform_indices = @transform_4, window_bounds = array<i64: 1, 128>}, {pipeline_mode = #tpu.pipeline_mode<synchronous>, transform_indices = @transform_5, window_bounds = array<i64: 128, 784>}, {pipeline_mode = #tpu.pipeline_mode<synchronous>, transform_indices = @transform_6, window_bounds = array<i64: 1, 784>}, {transform_indices = @transform_7, window_bounds = array<i64: 8, 784>}]} {
    %c0 = arith.constant 0 : index
    %c0_0 = arith.constant 0 : index
    %0 = vector.load %arg1[%c0, %c0_0] : memref<8x10xf32, #tpu.memory_space<vmem>>, vector<8x10xf32>
    %1 = arith.truncf %0 : vector<8x10xf32> to vector<8x10xbf16>
    %c0_1 = arith.constant 0 : index
    %c0_2 = arith.constant 0 : index
    %2 = vector.load %arg2[%c0_1, %c0_2] : memref<10x32xbf16, #tpu.memory_space<vmem>>, vector<10x32xbf16>
    %cst = arith.constant dense<0.000000e+00> : vector<8x32xf32>
    %3 = tpu.matmul %1, %2, %cst {dimension_numbers = #tpu.dot_dimension_numbers<[1], [0], [0], [1], [0, 0, 1, 1], [], []>} : vector<8x10xbf16>, vector<10x32xbf16>, vector<8x32xf32> -> vector<8x32xf32>
    %c0_3 = arith.constant 0 : index
    %c0_4 = arith.constant 0 : index
    %4 = vector.load %arg3[%c0_3, %c0_4] : memref<1x32xf32, #tpu.memory_space<vmem>>, vector<1x32xf32>
    %5 = vector.broadcast %4 : vector<1x32xf32> to vector<8x32xf32>
    %6 = arith.addf %3, %5 : vector<8x32xf32>
    %cst_5 = arith.constant 0.000000e+00 : f32
    %7 = vector.broadcast %cst_5 : f32 to vector<8x32xf32>
    %8 = arith.maximumf %6, %7 : vector<8x32xf32>
    %9 = arith.truncf %8 : vector<8x32xf32> to vector<8x32xbf16>
    %c0_6 = arith.constant 0 : index
    %c0_7 = arith.constant 0 : index
    %10 = vector.load %arg4[%c0_6, %c0_7] : memref<32x128xbf16, #tpu.memory_space<vmem>>, vector<32x128xbf16>
    %cst_8 = arith.constant dense<0.000000e+00> : vector<8x128xf32>
    %11 = tpu.matmul %9, %10, %cst_8 {dimension_numbers = #tpu.dot_dimension_numbers<[1], [0], [0], [1], [0, 0, 1, 1], [], []>} : vector<8x32xbf16>, vector<32x128xbf16>, vector<8x128xf32> -> vector<8x128xf32>
    %c0_9 = arith.constant 0 : index
    %c0_10 = arith.constant 0 : index
    %12 = vector.load %arg5[%c0_9, %c0_10] : memref<1x128xf32, #tpu.memory_space<vmem>>, vector<1x128xf32>
    %13 = vector.broadcast %12 : vector<1x128xf32> to vector<8x128xf32>
    %14 = arith.addf %11, %13 : vector<8x128xf32>
    %cst_11 = arith.constant 0.000000e+00 : f32
    %15 = vector.broadcast %cst_11 : f32 to vector<8x128xf32>
    %16 = arith.maximumf %14, %15 : vector<8x128xf32>
    %17 = arith.truncf %16 : vector<8x128xf32> to vector<8x128xbf16>
    %c0_12 = arith.constant 0 : index
    %c0_13 = arith.constant 0 : index
    %18 = vector.load %arg6[%c0_12, %c0_13] : memref<128x784xbf16, #tpu.memory_space<vmem>>, vector<128x784xbf16>
    %cst_14 = arith.constant dense<0.000000e+00> : vector<8x784xf32>
    %19 = tpu.matmul %17, %18, %cst_14 {dimension_numbers = #tpu.dot_dimension_numbers<[1], [0], [0], [1], [0, 0, 1, 1], [], []>} : vector<8x128xbf16>, vector<128x784xbf16>, vector<8x784xf32> -> vector<8x784xf32>
    %c0_15 = arith.constant 0 : index
    %c0_16 = arith.constant 0 : index
    %20 = vector.load %arg7[%c0_15, %c0_16] : memref<1x784xf32, #tpu.memory_space<vmem>>, vector<1x784xf32>
    %21 = vector.broadcast %20 : vector<1x784xf32> to vector<8x784xf32>
    %22 = arith.addf %19, %21 : vector<8x784xf32>
    %cst_17 = arith.constant 0.000000e+00 : f32
    %23 = vector.broadcast %cst_17 : f32 to vector<8x784xf32>
    %24 = arith.subf %23, %22 : vector<8x784xf32>
    %25 = math.exp %24 : vector<8x784xf32>
    %cst_18 = arith.constant 1.000000e+00 : f32
    %26 = vector.broadcast %cst_18 : f32 to vector<8x784xf32>
    %27 = arith.addf %26, %25 : vector<8x784xf32>
    %28 = tpu.reciprocal %27 {approx = true} : vector<8x784xf32> -> vector<8x784xf32>
    %29 = arith.truncf %28 : vector<8x784xf32> to vector<8x784xbf16>
    %c0_19 = arith.constant 0 : index
    %c0_20 = arith.constant 0 : index
    %30 = vector.load %arg8[%c0_19, %c0_20] : memref<8x784xbf16, #tpu.memory_space<vmem>>, vector<8x784xbf16>
    tpu.vector_store %arg8[%c0_19, %c0_20], %29 {strides = array<i32>} : memref<8x784xbf16, #tpu.memory_space<vmem>>, vector<8x784xbf16>,
    return
  }
  func.func @transform_0(%arg0: i32) -> (i32, i32) {
    %c0_i32 = arith.constant 0 : i32
    %c0_i32_0 = arith.constant 0 : i32
    return %arg0, %c0_i32 : i32, i32
  }
  func.func @transform_1(%arg0: i32) -> (i32, i32) {
    %c0_i32 = arith.constant 0 : i32
    %c0_i32_0 = arith.constant 0 : i32
    %c0_i32_1 = arith.constant 0 : i32
    return %c0_i32, %c0_i32_0 : i32, i32
  }
  func.func @transform_2(%arg0: i32) -> (i32, i32) {
    %c0_i32 = arith.constant 0 : i32
    %c0_i32_0 = arith.constant 0 : i32
    %c0_i32_1 = arith.constant 0 : i32
    return %c0_i32, %c0_i32_0 : i32, i32
  }
  func.func @transform_3(%arg0: i32) -> (i32, i32) {
    %c0_i32 = arith.constant 0 : i32
    %c0_i32_0 = arith.constant 0 : i32
    %c0_i32_1 = arith.constant 0 : i32
    return %c0_i32, %c0_i32_0 : i32, i32
  }
  func.func @transform_4(%arg0: i32) -> (i32, i32) {
    %c0_i32 = arith.constant 0 : i32
    %c0_i32_0 = arith.constant 0 : i32
    %c0_i32_1 = arith.constant 0 : i32
    return %c0_i32, %c0_i32_0 : i32, i32
  }
  func.func @transform_5(%arg0: i32) -> (i32, i32) {
    %c0_i32 = arith.constant 0 : i32
    %c0_i32_0 = arith.constant 0 : i32
    %c0_i32_1 = arith.constant 0 : i32
    return %c0_i32, %c0_i32_0 : i32, i32
  }
  func.func @transform_6(%arg0: i32) -> (i32, i32) {
    %c0_i32 = arith.constant 0 : i32
    %c0_i32_0 = arith.constant 0 : i32
    %c0_i32_1 = arith.constant 0 : i32
    return %c0_i32, %c0_i32_0 : i32, i32
  }
  func.func @transform_7(%arg0: i32) -> (i32, i32) {
    %c0_i32 = arith.constant 0 : i32
    %c0_i32_0 = arith.constant 0 : i32
    return %arg0, %c0_i32 : i32, i32
  }
}

</mosaic_0001>

<llo_original>
// kernel: _lambda_.1
$region0: #{_lambda_.1}
  #allocation0 [shape = 'u32[]', space=smem, size = 0x4, offset = 0x4, fixed_abs, tag = 'smem constant byte address 0x4 - core index']
  #allocation1 [shape = 'u32[144,128]{1,0:T(1,128)}', space=vmem, size = 0x12000, scoped, tag = 'internal scratch']
  %s0 = inlined_call_operand.vmem [shape: f32[8,10], index: 0, kind: input, shape index: {}]
  %s1 = inlined_call_operand.vmem [shape: bf16[10,32], index: 1, kind: input, shape index: {}]
  %s2 = inlined_call_operand.vmem [shape: f32[1,32], index: 2, kind: input, shape index: {}]
  %s3 = inlined_call_operand.vmem [shape: bf16[32,128], index: 3, kind: input, shape index: {}]
  %s4 = inlined_call_operand.vmem [shape: f32[1,128], index: 4, kind: input, shape index: {}]
  %s5 = inlined_call_operand.vmem [shape: bf16[128,784], index: 5, kind: input, shape index: {}]
  %s6 = inlined_call_operand.vmem [shape: f32[1,784], index: 6, kind: input, shape index: {}]
  %s7 = inlined_call_operand.hbm [shape: bf16[8,784], index: 7, kind: output, shape index: {}]
  %s8 = sld [smem:[#allocation0]]
  $region38: #{_lambda_.1} parent=0
    _
  %s10 = ssub.s32 1, %s8
  %s11 = scalar_select 0, %s10, %s8
  $region1: #{_lambda_.1} parent=0
    #allocation2 [shape = 'u8[14336]{0}', space=vmem, size = 0x3800, scoped, tag = 'output window, operand 0, single buffered']
    #allocation3 [shape = 's32[1]{0}', space=sflag, size = 0x4, scoped, tag = 'scoped memory for _lambda_.1']
    %12 = vsyncpa [#allocation3], 0
    // Predicated region
    $region2: #{_lambda_.1} parent=1 // pred_check
      _
    $region3: #{_lambda_.1} parent=1 // pred_check_branch
      %14 = sbr.rel (0) target = $region5
    $region4: #{_lambda_.1} parent=1 // pred_region
      _
    $region5: #{_lambda_.1} parent=1 // pred_fallthru
      _
    // Predicated region
    $region6: #{_lambda_.1} parent=1 // pred_check
      _
    $region7: #{_lambda_.1} parent=1 // pred_check_branch
      %16 = sbr.rel (0) target = $region9
    $region8: #{_lambda_.1} parent=1 // pred_region
      _
    $region9: #{_lambda_.1} parent=1 // pred_fallthru
      _
    // Predicated region
    $region10: #{_lambda_.1} parent=1 // pred_check
      _
    $region11: #{_lambda_.1} parent=1 // pred_check_branch
      %18 = sbr.rel (0) target = $region13
    $region12: #{_lambda_.1} parent=1 // pred_region
      _
    $region13: #{_lambda_.1} parent=1 // pred_fallthru
      _
    // Predicated region
    $region14: #{_lambda_.1} parent=1 // pred_check
      _
    $region15: #{_lambda_.1} parent=1 // pred_check_branch
      %20 = sbr.rel (0) target = $region17
    $region16: #{_lambda_.1} parent=1 // pred_region
      _
    $region17: #{_lambda_.1} parent=1 // pred_fallthru
      _
    // Predicated region
    $region18: #{_lambda_.1} parent=1 // pred_check
      _
    $region19: #{_lambda_.1} parent=1 // pred_check_branch
      %22 = sbr.rel (0) target = $region21
    $region20: #{_lambda_.1} parent=1 // pred_region
      _
    $region21: #{_lambda_.1} parent=1 // pred_fallthru
      _
    // Predicated region
    $region22: #{_lambda_.1} parent=1 // pred_check
      _
    $region23: #{_lambda_.1} parent=1 // pred_check_branch
      %24 = sbr.rel (0) target = $region25
    $region24: #{_lambda_.1} parent=1 // pred_region
      _
    $region25: #{_lambda_.1} parent=1 // pred_fallthru
      _
    // Predicated region
    $region26: #{_lambda_.1} parent=1 // pred_check
      _
    $region27: #{_lambda_.1} parent=1 // pred_check_branch
      %26 = sbr.rel (0) target = $region29
    $region28: #{_lambda_.1} parent=1 // pred_region
      _
    $region29: #{_lambda_.1} parent=1 // pred_fallthru
      _
    %v28 = vld [vmem:[%s0] sm:$0xff]
    %v29 = vpack.c.bf16 %v28, %v28
    %v30 = vld [vmem:[%s1] sm:$0xf]
    %v31 = vld [vmem:[%s1 + $0x4] sm:$0x1]
    %v32 = vld [vmem:[%s2] sm:$0x1]
    %v34 = vlaneseq
    %v35 = vshrl.u32 %v34, 7
    %v36 = vsub.s32 0, %v35
    %v37 = vrot.slane %v32, %v36
    %v41 = vunpack.c.l.b16 %v30
    %v42 = vunpack.c.l.b16 %v31
    %v43 = vpack.c.b16 %v42, %v41
    %vm44 = vcmask 80896
    %v46 = vsel %vm44, %v29, 0
    %vm48 = vcmask 1044480
    %v50 = vsel %vm48, %v43, 0
    %52 = vmatprep.subr.bf16.mxu0 0
    %53 = vmatpush1.bf16.msra.mxu0 0
    %54 = vmatprep.subr.bf16.mxu0 0
    %55 = vmatpush1.bf16.msra.mxu0 0
    %56 = vmatprep.subr.bf16.mxu0 0
    %57 = vmatpush1.bf16.msra.mxu0 0
    %58 = vmatprep.subr.bf16.mxu0 0
    %59 = vmatpush1.bf16.msra.mxu0 0
    %60 = vmatprep.subr.bf16.mxu0 0
    %61 = vmatpush1.bf16.msra.mxu0 0
    %62 = vmatprep.subr.bf16.mxu0 0
    %63 = vmatpush1.bf16.msra.mxu0 0
    %64 = vmatprep.subr.bf16.mxu0 0
    %65 = vmatpush1.bf16.msra.mxu0 0
    %66 = vmatprep.subr.bf16.mxu0 0
    %67 = vmatpush1.bf16.msra.mxu0 %v50
    %68 = vmatprep.subr.bf16.mxu0 0
    %69 = vmatpush2.bf16.msra.mxu0 0
    %70 = vmatprep.subr.bf16.mxu0 0
    %71 = vmatpush2.bf16.msra.mxu0 0
    %72 = vmatprep.subr.bf16.mxu0 0
    %73 = vmatpush2.bf16.msra.mxu0 0
    %74 = vmatprep.subr.bf16.mxu0 0
    %75 = vmatpush2.bf16.msra.mxu0 0
    %76 = vmatprep.subr.bf16.mxu0 0
    %77 = vmatpush2.bf16.msra.mxu0 0
    %78 = vmatprep.subr.bf16.mxu0 0
    %79 = vmatpush2.bf16.msra.mxu0 0
    %80 = vmatprep.subr.bf16.mxu0 0
    %81 = vmatpush2.bf16.msra.mxu0 0
    %82 = vmatprep.subr.bf16.mxu0 0
    %83 = vmatpush2.bf16.msra.mxu0 0
    %84 = vmatprep.mubr.bf16.mxu0 0
    %85 = vmatmul.mubr.bf16.gmra.mxu0 %v46
    %v86 = vpop.f32.mrf.mxu0
    %v87 = vadd.f32 %v37, %v86
    %v88 = vpop.f32.mrf.mxu0
    %v89 = vpop.f32.mrf.mxu0
    %v90 = vpop.f32.mrf.mxu0
    %91 = vdwg.mxu0
    %v92 = vmax.f32 %v87, 0.0
    %v93 = vpack.c.bf16 %v92, %v92
    %v94 = vld [vmem:[%s3] sm:$0xf]
    %v95 = vld [vmem:[%s3 + $0x4] sm:$0xf]
    %v96 = vld [vmem:[%s3 + $0x8] sm:$0xf]
    %v97 = vld [vmem:[%s3 + $0xc] sm:$0xf]
    %v98 = vld [vmem:[%s4] sm:$0x1]
    %v100 = vlaneseq
    %v101 = vshrl.u32 %v100, 7
    %v102 = vsub.s32 0, %v101
    %v103 = vrot.slane %v98, %v102
    %v109 = vunpack.c.l.b16 %v94
    %v110 = vunpack.c.l.b16 %v95
    %v111 = vunpack.c.l.b16 %v96
    %v112 = vunpack.c.l.b16 %v97
    %v113 = vpack.c.b16 %v110, %v109
    %v114 = vpack.c.b16 %v112, %v111
    %vm117 = vcmask 261120
    %v119 = vsel %vm117, %v93, 0
    %121 = vmatprep.subr.bf16.mxu0 0
    %122 = vmatpush1.bf16.msra.mxu0 0
    %123 = vmatprep.subr.bf16.mxu0 0
    %124 = vmatpush1.bf16.msra.mxu0 0
    %125 = vmatprep.subr.bf16.mxu0 0
    %126 = vmatpush1.bf16.msra.mxu0 0
    %127 = vmatprep.subr.bf16.mxu0 0
    %128 = vmatpush1.bf16.msra.mxu0 0
    %129 = vmatprep.subr.bf16.mxu0 0
    %130 = vmatpush1.bf16.msra.mxu0 0
    %131 = vmatprep.subr.bf16.mxu0 0
    %132 = vmatpush1.bf16.msra.mxu0 0
    %133 = vmatprep.subr.bf16.mxu0 0
    %134 = vmatpush1.bf16.msra.mxu0 %v114
    %135 = vmatprep.subr.bf16.mxu0 0
    %136 = vmatpush1.bf16.msra.mxu0 %v113
    %137 = vmatprep.subr.bf16.mxu0 0
    %138 = vmatpush2.bf16.msra.mxu0 0
    %139 = vmatprep.subr.bf16.mxu0 0
    %140 = vmatpush2.bf16.msra.mxu0 0
    %141 = vmatprep.subr.bf16.mxu0 0
    %142 = vmatpush2.bf16.msra.mxu0 0
    %143 = vmatprep.subr.bf16.mxu0 0
    %144 = vmatpush2.bf16.msra.mxu0 0
    %145 = vmatprep.subr.bf16.mxu0 0
    %146 = vmatpush2.bf16.msra.mxu0 0
    %147 = vmatprep.subr.bf16.mxu0 0
    %148 = vmatpush2.bf16.msra.mxu0 0
    %149 = vmatprep.subr.bf16.mxu0 0
    %150 = vmatpush2.bf16.msra.mxu0 0
    %151 = vmatprep.subr.bf16.mxu0 0
    %152 = vmatpush2.bf16.msra.mxu0 0
    %153 = vmatprep.mubr.bf16.mxu0 0
    %154 = vmatmul.mubr.bf16.gmra.mxu0 %v119
    %v155 = vpop.f32.mrf.mxu0
    %v156 = vadd.f32 %v103, %v155
    %v157 = vpop.f32.mrf.mxu0
    %v158 = vpop.f32.mrf.mxu0
    %v159 = vpop.f32.mrf.mxu0
    %160 = vdwg.mxu0
    %v161 = vmax.f32 %v156, 0.0
    %v162 = vpack.c.bf16 %v161, %v161
    %v163 = vld [vmem:[%s5] sm:$0xff]
    %v164 = vld [vmem:[%s5 + $0x8] sm:$0xff]
    %v165 = vld [vmem:[%s5 + $0x10] sm:$0xff]
    %v166 = vld [vmem:[%s5 + $0x18] sm:$0xf]
    %v167 = vld [vmem:[%s5 + $0x1c] sm:$0xff]
    %v168 = vld [vmem:[%s5 + $0x24] sm:$0xff]
    %v169 = vld [vmem:[%s5 + $0x2c] sm:$0xff]
    %v170 = vld [vmem:[%s5 + $0x34] sm:$0xf]
    %v171 = vld [vmem:[%s5 + $0x38] sm:$0xff]
    %v172 = vld [vmem:[%s5 + $0x40] sm:$0xff]
    %v173 = vld [vmem:[%s5 + $0x48] sm:$0xff]
    %v174 = vld [vmem:[%s5 + $0x50] sm:$0xf]
    %v175 = vld [vmem:[%s5 + $0x54] sm:$0xff]
    %v176 = vld [vmem:[%s5 + $0x5c] sm:$0xff]
    %v177 = vld [vmem:[%s5 + $0x64] sm:$0xff]
    %v178 = vld [vmem:[%s5 + $0x6c] sm:$0xf]
    %v179 = vld [vmem:[%s5 + $0x70] sm:$0xff]
    %v180 = vld [vmem:[%s5 + $0x78] sm:$0xff]
    %v181 = vld [vmem:[%s5 + $0x80] sm:$0xff]
    %v182 = vld [vmem:[%s5 + $0x88] sm:$0xf]
    %v183 = vld [vmem:[%s5 + $0x8c] sm:$0xff]
    %v184 = vld [vmem:[%s5 + $0x94] sm:$0xff]
    %v185 = vld [vmem:[%s5 + $0x9c] sm:$0xff]
    %v186 = vld [vmem:[%s5 + $0xa4] sm:$0xf]
    %v187 = vld [vmem:[%s5 + $0xa8] sm:$0xff]
    %v188 = vld [vmem:[%s5 + $0xb0] sm:$0xff]
    %v189 = vld [vmem:[%s5 + $0xb8] sm:$0xff]
    %v190 = vld [vmem:[%s5 + $0xc0] sm:$0xf]
    %v191 = vld [vmem:[%s5 + $0xc4] sm:$0xff]
    %v192 = vld [vmem:[%s5 + $0xcc] sm:$0xff]
    %v193 = vld [vmem:[%s5 + $0xd4] sm:$0xff]
    %v194 = vld [vmem:[%s5 + $0xdc] sm:$0xf]
    %v195 = vld [vmem:[%s5 + $0xe0] sm:$0xff]
    %v196 = vld [vmem:[%s5 + $0xe8] sm:$0xff]
    %v197 = vld [vmem:[%s5 + $0xf0] sm:$0xff]
    %v198 = vld [vmem:[%s5 + $0xf8] sm:$0xf]
    %v199 = vld [vmem:[%s5 + $0xfc] sm:$0xff]
    %v200 = vld [vmem:[%s5 + $0x104] sm:$0xff]
    %v201 = vld [vmem:[%s5 + $0x10c] sm:$0xff]
    %v202 = vld [vmem:[%s5 + $0x114] sm:$0xf]
    %v203 = vld [vmem:[%s5 + $0x118] sm:$0xff]
    %v204 = vld [vmem:[%s5 + $0x120] sm:$0xff]
    %v205 = vld [vmem:[%s5 + $0x128] sm:$0xff]
    %v206 = vld [vmem:[%s5 + $0x130] sm:$0xf]
    %v207 = vld [vmem:[%s5 + $0x134] sm:$0xff]
    %v208 = vld [vmem:[%s5 + $0x13c] sm:$0xff]
    %v209 = vld [vmem:[%s5 + $0x144] sm:$0xff]
    %v210 = vld [vmem:[%s5 + $0x14c] sm:$0xf]
    %v211 = vld [vmem:[%s5 + $0x150] sm:$0xff]
    %v212 = vld [vmem:[%s5 + $0x158] sm:$0xff]
    %v213 = vld [vmem:[%s5 + $0x160] sm:$0xff]
    %v214 = vld [vmem:[%s5 + $0x168] sm:$0xf]
    %v215 = vld [vmem:[%s5 + $0x16c] sm:$0xff]
    %v216 = vld [vmem:[%s5 + $0x174] sm:$0xff]
    %v217 = vld [vmem:[%s5 + $0x17c] sm:$0xff]
    %v218 = vld [vmem:[%s5 + $0x184] sm:$0xf]
    %v219 = vld [vmem:[%s5 + $0x188] sm:$0xff]
    %v220 = vld [vmem:[%s5 + $0x190] sm:$0xff]
    %v221 = vld [vmem:[%s5 + $0x198] sm:$0xff]
    %v222 = vld [vmem:[%s5 + $0x1a0] sm:$0xf]
    %v223 = vld [vmem:[%s5 + $0x1a4] sm:$0xff]
    %v224 = vld [vmem:[%s5 + $0x1ac] sm:$0xff]
    %v225 = vld [vmem:[%s5 + $0x1b4] sm:$0xff]
    %v226 = vld [vmem:[%s5 + $0x1bc] sm:$0xf]
    %v227 = vld [vmem:[%s6] sm:$0x7f]
    %v229 = vlaneseq
    %v230 = vshrl.u32 %v229, 7
    %v231 = vsub.s32 0, %v230
    %v232 = vrot.slane %v227, %v231
    %v233 = vlaneseq
    %v234 = vshrl.u32 %v233, 7
    %v235 = vsub.s32 1, %v234
    %v236 = vrot.slane %v227, %v235
    %v237 = vlaneseq
    %v238 = vshrl.u32 %v237, 7
    %v239 = vsub.s32 2, %v238
    %v240 = vrot.slane %v227, %v239
    %v241 = vlaneseq
    %v242 = vshrl.u32 %v241, 7
    %v243 = vsub.s32 3, %v242
    %v244 = vrot.slane %v227, %v243
    %v245 = vlaneseq
    %v246 = vshrl.u32 %v245, 7
    %v247 = vsub.s32 4, %v246
    %v248 = vrot.slane %v227, %v247
    %v249 = vlaneseq
    %v250 = vshrl.u32 %v249, 7
    %v251 = vsub.s32 5, %v250
    %v252 = vrot.slane %v227, %v251
    %v253 = vlaneseq
    %v254 = vshrl.u32 %v253, 7
    %v255 = vsub.s32 6, %v254
    %v256 = vrot.slane %v227, %v255
    %v328 = vunpack.c.l.b16 %v163
    %v329 = vunpack.c.h.b16 %v163
    %v330 = vunpack.c.l.b16 %v164
    %v331 = vunpack.c.h.b16 %v164
    %v332 = vunpack.c.l.b16 %v165
    %v333 = vunpack.c.h.b16 %v165
    %v334 = vunpack.c.l.b16 %v166
    %v335 = vunpack.c.l.b16 %v167
    %v336 = vunpack.c.h.b16 %v167
    %v337 = vunpack.c.l.b16 %v168
    %v338 = vunpack.c.h.b16 %v168
    %v339 = vunpack.c.l.b16 %v169
    %v340 = vunpack.c.h.b16 %v169
    %v341 = vunpack.c.l.b16 %v170
    %v342 = vunpack.c.l.b16 %v171
    %v343 = vunpack.c.h.b16 %v171
    %v344 = vunpack.c.l.b16 %v172
    %v345 = vunpack.c.h.b16 %v172
    %v346 = vunpack.c.l.b16 %v173
    %v347 = vunpack.c.h.b16 %v173
    %v348 = vunpack.c.l.b16 %v174
    %v349 = vunpack.c.l.b16 %v175
    %v350 = vunpack.c.h.b16 %v175
    %v351 = vunpack.c.l.b16 %v176
    %v352 = vunpack.c.h.b16 %v176
    %v353 = vunpack.c.l.b16 %v177
    %v354 = vunpack.c.h.b16 %v177
    %v355 = vunpack.c.l.b16 %v178
    %v356 = vunpack.c.l.b16 %v179
    %v357 = vunpack.c.h.b16 %v179
    %v358 = vunpack.c.l.b16 %v180
    %v359 = vunpack.c.h.b16 %v180
    %v360 = vunpack.c.l.b16 %v181
    %v361 = vunpack.c.h.b16 %v181
    %v362 = vunpack.c.l.b16 %v182
    %v363 = vunpack.c.l.b16 %v183
    %v364 = vunpack.c.h.b16 %v183
    %v365 = vunpack.c.l.b16 %v184
    %v366 = vunpack.c.h.b16 %v184
    %v367 = vunpack.c.l.b16 %v185
    %v368 = vunpack.c.h.b16 %v185
    %v369 = vunpack.c.l.b16 %v186
    %v370 = vunpack.c.l.b16 %v187
    %v371 = vunpack.c.h.b16 %v187
    %v372 = vunpack.c.l.b16 %v188
    %v373 = vunpack.c.h.b16 %v188
    %v374 = vunpack.c.l.b16 %v189
    %v375 = vunpack.c.h.b16 %v189
    %v376 = vunpack.c.l.b16 %v190
    %v377 = vunpack.c.l.b16 %v191
    %v378 = vunpack.c.h.b16 %v191
    %v379 = vunpack.c.l.b16 %v192
    %v380 = vunpack.c.h.b16 %v192
    %v381 = vunpack.c.l.b16 %v193
    %v382 = vunpack.c.h.b16 %v193
    %v383 = vunpack.c.l.b16 %v194
    %v384 = vunpack.c.l.b16 %v195
    %v385 = vunpack.c.h.b16 %v195
    %v386 = vunpack.c.l.b16 %v196
    %v387 = vunpack.c.h.b16 %v196
    %v388 = vunpack.c.l.b16 %v197
    %v389 = vunpack.c.h.b16 %v197
    %v390 = vunpack.c.l.b16 %v198
    %v391 = vunpack.c.l.b16 %v199
    %v392 = vunpack.c.h.b16 %v199
    %v393 = vunpack.c.l.b16 %v200
    %v394 = vunpack.c.h.b16 %v200
    %v395 = vunpack.c.l.b16 %v201
    %v396 = vunpack.c.h.b16 %v201
    %v397 = vunpack.c.l.b16 %v202
    %v398 = vunpack.c.l.b16 %v203
    %v399 = vunpack.c.h.b16 %v203
    %v400 = vunpack.c.l.b16 %v204
    %v401 = vunpack.c.h.b16 %v204
    %v402 = vunpack.c.l.b16 %v205
    %v403 = vunpack.c.h.b16 %v205
    %v404 = vunpack.c.l.b16 %v206
    %v405 = vunpack.c.l.b16 %v207
    %v406 = vunpack.c.h.b16 %v207
    %v407 = vunpack.c.l.b16 %v208
    %v408 = vunpack.c.h.b16 %v208
    %v409 = vunpack.c.l.b16 %v209
    %v410 = vunpack.c.h.b16 %v209
    %v411 = vunpack.c.l.b16 %v210
    %v412 = vunpack.c.l.b16 %v211
    %v413 = vunpack.c.h.b16 %v211
    %v414 = vunpack.c.l.b16 %v212
    %v415 = vunpack.c.h.b16 %v212
    %v416 = vunpack.c.l.b16 %v213
    %v417 = vunpack.c.h.b16 %v213
    %v418 = vunpack.c.l.b16 %v214
    %v419 = vunpack.c.l.b16 %v215
    %v420 = vunpack.c.h.b16 %v215
    %v421 = vunpack.c.l.b16 %v216
    %v422 = vunpack.c.h.b16 %v216
    %v423 = vunpack.c.l.b16 %v217
    %v424 = vunpack.c.h.b16 %v217
    %v425 = vunpack.c.l.b16 %v218
    %v426 = vunpack.c.l.b16 %v219
    %v427 = vunpack.c.h.b16 %v219
    %v428 = vunpack.c.l.b16 %v220
    %v429 = vunpack.c.h.b16 %v220
    %v430 = vunpack.c.l.b16 %v221
    %v431 = vunpack.c.h.b16 %v221
    %v432 = vunpack.c.l.b16 %v222
    %v433 = vunpack.c.l.b16 %v223
    %v434 = vunpack.c.h.b16 %v223
    %v435 = vunpack.c.l.b16 %v224
    %v436 = vunpack.c.h.b16 %v224
    %v437 = vunpack.c.l.b16 %v225
    %v438 = vunpack.c.h.b16 %v225
    %v439 = vunpack.c.l.b16 %v226
    %v440 = vpack.c.b16 %v335, %v328
    %v441 = vpack.c.b16 %v336, %v329
    %v442 = vpack.c.b16 %v337, %v330
    %v443 = vpack.c.b16 %v338, %v331
    %v444 = vpack.c.b16 %v339, %v332
    %v445 = vpack.c.b16 %v340, %v333
    %v446 = vpack.c.b16 %v341, %v334
    %v447 = vpack.c.b16 %v349, %v342
    %v448 = vpack.c.b16 %v350, %v343
    %v449 = vpack.c.b16 %v351, %v344
    %v450 = vpack.c.b16 %v352, %v345
    %v451 = vpack.c.b16 %v353, %v346
    %v452 = vpack.c.b16 %v354, %v347
    %v453 = vpack.c.b16 %v355, %v348
    %v454 = vpack.c.b16 %v363, %v356
    %v455 = vpack.c.b16 %v364, %v357
    %v456 = vpack.c.b16 %v365, %v358
    %v457 = vpack.c.b16 %v366, %v359
    %v458 = vpack.c.b16 %v367, %v360
    %v459 = vpack.c.b16 %v368, %v361
    %v460 = vpack.c.b16 %v369, %v362
    %v461 = vpack.c.b16 %v377, %v370
    %v462 = vpack.c.b16 %v378, %v371
    %v463 = vpack.c.b16 %v379, %v372
    %v464 = vpack.c.b16 %v380, %v373
    %v465 = vpack.c.b16 %v381, %v374
    %v466 = vpack.c.b16 %v382, %v375
    %v467 = vpack.c.b16 %v383, %v376
    %v468 = vpack.c.b16 %v391, %v384
    %v469 = vpack.c.b16 %v392, %v385
    %v470 = vpack.c.b16 %v393, %v386
    %v471 = vpack.c.b16 %v394, %v387
    %v472 = vpack.c.b16 %v395, %v388
    %v473 = vpack.c.b16 %v396, %v389
    %v474 = vpack.c.b16 %v397, %v390
    %v475 = vpack.c.b16 %v405, %v398
    %v476 = vpack.c.b16 %v406, %v399
    %v477 = vpack.c.b16 %v407, %v400
    %v478 = vpack.c.b16 %v408, %v401
    %v479 = vpack.c.b16 %v409, %v402
    %v480 = vpack.c.b16 %v410, %v403
    %v481 = vpack.c.b16 %v411, %v404
    %v482 = vpack.c.b16 %v419, %v412
    %v483 = vpack.c.b16 %v420, %v413
    %v484 = vpack.c.b16 %v421, %v414
    %v485 = vpack.c.b16 %v422, %v415
    %v486 = vpack.c.b16 %v423, %v416
    %v487 = vpack.c.b16 %v424, %v417
    %v488 = vpack.c.b16 %v425, %v418
    %v489 = vpack.c.b16 %v433, %v426
    %v490 = vpack.c.b16 %v434, %v427
    %v491 = vpack.c.b16 %v435, %v428
    %v492 = vpack.c.b16 %v436, %v429
    %v493 = vpack.c.b16 %v437, %v430
    %v494 = vpack.c.b16 %v438, %v431
    %v495 = vpack.c.b16 %v439, %v432
    %552 = vmatprep.subr.bf16.mxu0 %v490
    %553 = vmatpush1.bf16.msra.mxu0 %v489
    %554 = vmatprep.subr.bf16.mxu0 %v483
    %555 = vmatpush1.bf16.msra.mxu0 %v482
    %556 = vmatprep.subr.bf16.mxu0 %v476
    %557 = vmatpush1.bf16.msra.mxu0 %v475
    %558 = vmatprep.subr.bf16.mxu0 %v469
    %559 = vmatpush1.bf16.msra.mxu0 %v468
    %560 = vmatprep.subr.bf16.mxu0 %v462
    %561 = vmatpush1.bf16.msra.mxu0 %v461
    %562 = vmatprep.subr.bf16.mxu0 %v455
    %563 = vmatpush1.bf16.msra.mxu0 %v454
    %564 = vmatprep.subr.bf16.mxu0 %v448
    %565 = vmatpush1.bf16.msra.mxu0 %v447
    %566 = vmatprep.subr.bf16.mxu0 %v441
    %567 = vmatpush1.bf16.msra.mxu0 %v440
    %568 = vmatprep.subr.bf16.mxu0 0
    %569 = vmatpush2.bf16.msra.mxu0 0
    %570 = vmatprep.subr.bf16.mxu0 0
    %571 = vmatpush2.bf16.msra.mxu0 0
    %572 = vmatprep.subr.bf16.mxu0 0
    %573 = vmatpush2.bf16.msra.mxu0 0
    %574 = vmatprep.subr.bf16.mxu0 0
    %575 = vmatpush2.bf16.msra.mxu0 0
    %576 = vmatprep.subr.bf16.mxu0 0
    %577 = vmatpush2.bf16.msra.mxu0 0
    %578 = vmatprep.subr.bf16.mxu0 0
    %579 = vmatpush2.bf16.msra.mxu0 0
    %580 = vmatprep.subr.bf16.mxu0 0
    %581 = vmatpush2.bf16.msra.mxu0 0
    %582 = vmatprep.subr.bf16.mxu0 0
    %583 = vmatpush2.bf16.msra.mxu0 0
    %584 = vmatprep.mubr.bf16.mxu0 0
    %585 = vmatmul.mubr.bf16.gmra.mxu0 %v162
    %v586 = vpop.f32.mrf.mxu0
    %v587 = vadd.f32 %v232, %v586
    %v588 = vpop.f32.mrf.mxu0
    %v589 = vadd.f32 %v236, %v588
    %v590 = vpop.f32.mrf.mxu0
    %v591 = vpop.f32.mrf.mxu0
    %592 = vdwg.mxu0
    %593 = vmatprep.subr.bf16.mxu0 %v492
    %594 = vmatpush1.bf16.msra.mxu0 %v491
    %595 = vmatprep.subr.bf16.mxu0 %v485
    %596 = vmatpush1.bf16.msra.mxu0 %v484
    %597 = vmatprep.subr.bf16.mxu0 %v478
    %598 = vmatpush1.bf16.msra.mxu0 %v477
    %599 = vmatprep.subr.bf16.mxu0 %v471
    %600 = vmatpush1.bf16.msra.mxu0 %v470
    %601 = vmatprep.subr.bf16.mxu0 %v464
    %602 = vmatpush1.bf16.msra.mxu0 %v463
    %603 = vmatprep.subr.bf16.mxu0 %v457
    %604 = vmatpush1.bf16.msra.mxu0 %v456
    %605 = vmatprep.subr.bf16.mxu0 %v450
    %606 = vmatpush1.bf16.msra.mxu0 %v449
    %607 = vmatprep.subr.bf16.mxu0 %v443
    %608 = vmatpush1.bf16.msra.mxu0 %v442
    %609 = vmatprep.subr.bf16.mxu0 0
    %610 = vmatpush2.bf16.msra.mxu0 0
    %611 = vmatprep.subr.bf16.mxu0 0
    %612 = vmatpush2.bf16.msra.mxu0 0
    %613 = vmatprep.subr.bf16.mxu0 0
    %614 = vmatpush2.bf16.msra.mxu0 0
    %615 = vmatprep.subr.bf16.mxu0 0
    %616 = vmatpush2.bf16.msra.mxu0 0
    %617 = vmatprep.subr.bf16.mxu0 0
    %618 = vmatpush2.bf16.msra.mxu0 0
    %619 = vmatprep.subr.bf16.mxu0 0
    %620 = vmatpush2.bf16.msra.mxu0 0
    %621 = vmatprep.subr.bf16.mxu0 0
    %622 = vmatpush2.bf16.msra.mxu0 0
    %623 = vmatprep.subr.bf16.mxu0 0
    %624 = vmatpush2.bf16.msra.mxu0 0
    %625 = vmatprep.mubr.bf16.mxu0 0
    %626 = vmatmul.mubr.bf16.gmra.mxu0 %v162
    %v627 = vpop.f32.mrf.mxu0
    %v628 = vadd.f32 %v240, %v627
    %v629 = vpop.f32.mrf.mxu0
    %v630 = vadd.f32 %v244, %v629
    %v631 = vpop.f32.mrf.mxu0
    %v632 = vpop.f32.mrf.mxu0
    %633 = vdwg.mxu0
    %634 = vmatprep.subr.bf16.mxu0 %v494
    %635 = vmatpush1.bf16.msra.mxu0 %v493
    %636 = vmatprep.subr.bf16.mxu0 %v487
    %637 = vmatpush1.bf16.msra.mxu0 %v486
    %638 = vmatprep.subr.bf16.mxu0 %v480
    %639 = vmatpush1.bf16.msra.mxu0 %v479
    %640 = vmatprep.subr.bf16.mxu0 %v473
    %641 = vmatpush1.bf16.msra.mxu0 %v472
    %642 = vmatprep.subr.bf16.mxu0 %v466
    %643 = vmatpush1.bf16.msra.mxu0 %v465
    %644 = vmatprep.subr.bf16.mxu0 %v459
    %645 = vmatpush1.bf16.msra.mxu0 %v458
    %646 = vmatprep.subr.bf16.mxu0 %v452
    %647 = vmatpush1.bf16.msra.mxu0 %v451
    %648 = vmatprep.subr.bf16.mxu0 %v445
    %649 = vmatpush1.bf16.msra.mxu0 %v444
    %650 = vmatprep.subr.bf16.mxu0 0
    %651 = vmatpush2.bf16.msra.mxu0 0
    %652 = vmatprep.subr.bf16.mxu0 0
    %653 = vmatpush2.bf16.msra.mxu0 0
    %654 = vmatprep.subr.bf16.mxu0 0
    %655 = vmatpush2.bf16.msra.mxu0 0
    %656 = vmatprep.subr.bf16.mxu0 0
    %657 = vmatpush2.bf16.msra.mxu0 0
    %658 = vmatprep.subr.bf16.mxu0 0
    %659 = vmatpush2.bf16.msra.mxu0 0
    %660 = vmatprep.subr.bf16.mxu0 0
    %661 = vmatpush2.bf16.msra.mxu0 0
    %662 = vmatprep.subr.bf16.mxu0 0
    %663 = vmatpush2.bf16.msra.mxu0 0
    %664 = vmatprep.subr.bf16.mxu0 0
    %665 = vmatpush2.bf16.msra.mxu0 0
    %666 = vmatprep.mubr.bf16.mxu0 0
    %667 = vmatmul.mubr.bf16.gmra.mxu0 %v162
    %v668 = vpop.f32.mrf.mxu0
    %v669 = vadd.f32 %v248, %v668
    %v670 = vpop.f32.mrf.mxu0
    %v671 = vadd.f32 %v252, %v670
    %v672 = vpop.f32.mrf.mxu0
    %v673 = vpop.f32.mrf.mxu0
    %674 = vdwg.mxu0
    %675 = vmatprep.subr.bf16.mxu0 0
    %676 = vmatpush1.bf16.msra.mxu0 %v495
    %677 = vmatprep.subr.bf16.mxu0 0
    %678 = vmatpush1.bf16.msra.mxu0 %v488
    %679 = vmatprep.subr.bf16.mxu0 0
    %680 = vmatpush1.bf16.msra.mxu0 %v481
    %681 = vmatprep.subr.bf16.mxu0 0
    %682 = vmatpush1.bf16.msra.mxu0 %v474
    %683 = vmatprep.subr.bf16.mxu0 0
    %684 = vmatpush1.bf16.msra.mxu0 %v467
    %685 = vmatprep.subr.bf16.mxu0 0
    %686 = vmatpush1.bf16.msra.mxu0 %v460
    %687 = vmatprep.subr.bf16.mxu0 0
    %688 = vmatpush1.bf16.msra.mxu0 %v453
    %689 = vmatprep.subr.bf16.mxu0 0
    %690 = vmatpush1.bf16.msra.mxu0 %v446
    %691 = vmatprep.subr.bf16.mxu0 0
    %692 = vmatpush2.bf16.msra.mxu0 0
    %693 = vmatprep.subr.bf16.mxu0 0
    %694 = vmatpush2.bf16.msra.mxu0 0
    %695 = vmatprep.subr.bf16.mxu0 0
    %696 = vmatpush2.bf16.msra.mxu0 0
    %697 = vmatprep.subr.bf16.mxu0 0
    %698 = vmatpush2.bf16.msra.mxu0 0
    %699 = vmatprep.subr.bf16.mxu0 0
    %700 = vmatpush2.bf16.msra.mxu0 0
    %701 = vmatprep.subr.bf16.mxu0 0
    %702 = vmatpush2.bf16.msra.mxu0 0
    %703 = vmatprep.subr.bf16.mxu0 0
    %704 = vmatpush2.bf16.msra.mxu0 0
    %705 = vmatprep.subr.bf16.mxu0 0
    %706 = vmatpush2.bf16.msra.mxu0 0
    %707 = vmatprep.mubr.bf16.mxu0 0
    %708 = vmatmul.mubr.bf16.gmra.mxu0 %v162
    %v709 = vpop.f32.mrf.mxu0
    %v710 = vadd.f32 %v256, %v709
    %v711 = vpop.f32.mrf.mxu0
    %v712 = vpop.f32.mrf.mxu0
    %v713 = vpop.f32.mrf.mxu0
    %714 = vdwg.mxu0
    %v715 = vsub.f32 0.0, %v587
    %v716 = vsub.f32 0.0, %v589
    %v717 = vsub.f32 0.0, %v628
    %v718 = vsub.f32 0.0, %v630
    %v719 = vsub.f32 0.0, %v669
    %v720 = vsub.f32 0.0, %v671
    %v721 = vsub.f32 0.0, %v710
    %v722 = vmul.f32 %v715, 1.442695
    %v723 = vpow.pop %v722
    %v724 = vmul.f32 %v716, 1.442695
    %v725 = vpow.pop %v724
    %v726 = vmul.f32 %v717, 1.442695
    %v727 = vpow.pop %v726
    %v728 = vmul.f32 %v718, 1.442695
    %v729 = vpow.pop %v728
    %v730 = vmul.f32 %v719, 1.442695
    %v731 = vpow.pop %v730
    %v732 = vmul.f32 %v720, 1.442695
    %v733 = vpow.pop %v732
    %v734 = vmul.f32 %v721, 1.442695
    %v735 = vpow.pop %v734
    %v736 = vadd.f32 %v723, 1.0
    %v737 = vadd.f32 %v725, 1.0
    %v738 = vadd.f32 %v727, 1.0
    %v739 = vadd.f32 %v729, 1.0
    %v740 = vadd.f32 %v731, 1.0
    %v741 = vadd.f32 %v733, 1.0
    %v742 = vadd.f32 %v735, 1.0
    %v743 = vrcp.pop %v736
    %v744 = vrcp.pop %v737
    %v745 = vrcp.pop %v738
    %v746 = vrcp.pop %v739
    %v747 = vrcp.pop %v740
    %v748 = vrcp.pop %v741
    %v749 = vrcp.pop %v742
    %v750 = vpack.c.bf16 %v743, %v743
    %v751 = vpack.c.bf16 %v744, %v744
    %v752 = vpack.c.bf16 %v745, %v745
    %v753 = vpack.c.bf16 %v746, %v746
    %v754 = vpack.c.bf16 %v747, %v747
    %v755 = vpack.c.bf16 %v748, %v748
    %v756 = vpack.c.bf16 %v749, %v749
    %v764 = vunpack.c.l.b16 %v750
    %v765 = vunpack.c.l.b16 %v751
    %v766 = vunpack.c.l.b16 %v752
    %v767 = vunpack.c.l.b16 %v753
    %v768 = vunpack.c.l.b16 %v754
    %v769 = vunpack.c.l.b16 %v755
    %v770 = vunpack.c.l.b16 %v756
    %v771 = vpack.c.b16 %v765, %v764
    %v772 = vpack.c.b16 %v767, %v766
    %v773 = vpack.c.b16 %v769, %v768
    %v774 = vpack.c.b16 %v770, %v770
    %779 = vst [vmem:[#allocation2] sm:$0xff] %v771
    %780 = vst [vmem:[#allocation2 + $0x8] sm:$0xff] %v772
    %781 = vst [vmem:[#allocation2 + $0x10] sm:$0xff] %v773
    %vm782 = vcmask 125952
    %783 = vst.msk [vmem:[#allocation2 + $0x18] sm:$0xf] %vm782, %v774
    // Predicated region
    $region30: #{_lambda_.1} parent=1 // pred_check
      _
    $region31: #{_lambda_.1} parent=1 // pred_check_branch
      %785 = sbr.rel (0) target = $region33
    $region32: #{_lambda_.1} parent=1 // pred_region
      %s787 = ssub.s32 448, 448
      %788 = vsyncadd [#allocation3], %s787
      %s790 = sshll.u32 [#allocation2], 4
      %s791 = int_to_ptr.vmem [resolvable:$true] %s790
      %793 = dma.vmem_to_hbm [thread:$0]  %s791, 448, %s7, [#allocation3]
    $region33: #{_lambda_.1} parent=1 // pred_fallthru
      _
    // Predicated region
    $region34: #{_lambda_.1} parent=1 // pred_check
      _
    $region35: #{_lambda_.1} parent=1 // pred_check_branch
      %795 = sbr.rel (0) target = $region37
    $region36: #{_lambda_.1} parent=1 // pred_region
      %796 = dma.done [#allocation3], 448
    $region37: #{_lambda_.1} parent=1 // pred_fallthru
      _
    %797 = vsyncpa [#allocation3], 1

</llo_original>
